<compile_context>
chip_gen: v5e
topology: v5e:2x2
jax: 0.10.0
libtpu: 0.0.40
codegen_flags: <defaults>
</compile_context>

<pallas_src>
import jax
import jax.numpy as jnp
from jax.experimental import pallas as pl
from jax.experimental.pallas import tpu as pltpu


def _prompt_concat_kernel(prefix_ref, ctx_ref, suffix_ref, out_ref):
    # prefix_ref: (CB, n_prefix, D)  per-class prefix tokens for this class block
    # ctx_ref:    (n_ctx, D)         shared learnable context (same block every step)
    # suffix_ref: (CB, n_suffix, D)  per-class suffix tokens for this class block
    # out_ref:    (CB, seq, D)       seq = n_prefix + n_ctx + n_suffix
    cb, seq, d = out_ref.shape
    n_prefix = prefix_ref.shape[1]
    n_ctx = ctx_ref.shape[0]
    out_dtype = out_ref.dtype

    # Three slice stores: stream ref -> vreg -> ref; only the vregs straddling
    # the token boundaries (sublane offsets n_prefix and n_prefix + n_ctx) are
    # masked. No concat temporary, no cross-sublane shuffle filler.
    out_ref[:, :n_prefix, :] = prefix_ref[...].astype(out_dtype)
    out_ref[:, n_prefix:n_prefix + n_ctx, :] = jnp.broadcast_to(
        ctx_ref[...].astype(out_dtype)[None, :, :], (cb, n_ctx, d))
    out_ref[:, n_prefix + n_ctx:, :] = suffix_ref[...].astype(out_dtype)


def _largest_divisor_leq(n, cap):
    cap = max(1, min(int(cap), int(n)))
    for d in range(cap, 0, -1):
        if n % d == 0:
            return d
    return 1


def vl_prompt_learner_forward(ctx, token_prefix, token_suffix,
                              *, class_block=None,
                              vmem_budget_bytes=24 * 1024 * 1024):
    """Pallas equivalent of VLPromptLearner.forward().

    ctx:          (n_ctx, ctx_dim)              learnable context vectors
    token_prefix: (n_cls, n_prefix, ctx_dim)    SOS-token embedding per class
    token_suffix: (n_cls, n_suffix, ctx_dim)    class-name + EOS embeddings
    returns:      (n_cls, seq, ctx_dim)         assembled prompt embeddings
                  (dtype follows the token embedding, as in the PyTorch module)
    """
    n_ctx, ctx_dim = ctx.shape
    n_cls, n_prefix, _ = token_prefix.shape
    n_suffix = token_suffix.shape[1]
    seq = n_prefix + n_ctx + n_suffix
    out_dtype = token_prefix.dtype
    itemsize = jnp.dtype(out_dtype).itemsize

    # Honest per-class, double-buffered VMEM footprint: prefix + suffix inputs
    # plus the full-seq output block (the kernel writes slices in place; there
    # is no concat temporary to account for).
    per_class = 2 * (n_prefix + n_suffix + seq) * ctx_dim * itemsize
    ctx_bytes = 2 * n_ctx * ctx_dim * jnp.dtype(ctx.dtype).itemsize

    if class_block is None:
        cb = max(1, (vmem_budget_bytes - ctx_bytes) // per_class)
        cb = int(min(cb, n_cls))
        # v7x: need >= 2 grid steps so the "parallel" axis can be sharded
        # across both TensorCores (free on single-TC v5e/v6e).
        if n_cls >= 2:
            cb = min(cb, pl.cdiv(n_cls, 2))
        # Avoid a ragged tail step when a nearby divisor of n_cls exists.
        d = _largest_divisor_leq(n_cls, cb)
        if d >= max(1, cb // 2):
            cb = d
        class_block = cb
    class_block = int(max(1, min(class_block, n_cls)))

    grid = (pl.cdiv(n_cls, class_block),)

    # Actual double-buffered per-step footprint; pin the scoped-VMEM limit to
    # it (with slack) so the budget is not silently capped at 16/32 MiB
    # defaults, while staying under v7x's 64 MiB per-TC physical ceiling.
    footprint = class_block * per_class + ctx_bytes
    vmem_limit = int(min(64 * 1024 * 1024,
                         max(16 * 1024 * 1024, 2 * footprint + (1 << 20))))

    return pl.pallas_call(
        _prompt_concat_kernel,
        out_shape=jax.ShapeDtypeStruct((n_cls, seq, ctx_dim), out_dtype),
        grid_spec=pltpu.PrefetchScalarGridSpec(
            num_scalar_prefetch=0,
            grid=grid,
            in_specs=[
                # per-class-block prefix tile
                pl.BlockSpec((class_block, n_prefix, ctx_dim),
                             lambda c: (c, 0, 0)),
                # shared ctx: same block every step (Pallas skips the re-fetch)
                pl.BlockSpec((n_ctx, ctx_dim), lambda c: (0, 0)),
                # per-class-block suffix tile
                pl.BlockSpec((class_block, n_suffix, ctx_dim),
                             lambda c: (c, 0, 0)),
            ],
            out_specs=pl.BlockSpec((class_block, seq, ctx_dim),
                                   lambda c: (c, 0, 0)),
        ),
        compiler_params=pltpu.CompilerParams(
            dimension_semantics=("parallel",),
            vmem_limit_bytes=vmem_limit),
    )(token_prefix, ctx, token_suffix)


if __name__ == "__main__":
    # Small synthetic shapes consistent with the module. ctx_dim is a multiple
    # of 128 (lane-dense stores); real CLIP dims (512/768) satisfy this too.
    n_cls, n_ctx, seq, ctx_dim = 10, 2, 8, 128
    n_prefix = 1
    n_suffix = seq - n_prefix - n_ctx

    key = jax.random.PRNGKey(0)
    k_ctx, k_emb = jax.random.split(key)

    # nn.init.normal_(ctx_vectors, std=0.02); learnable ctx kept in fp32.
    ctx_f32 = (0.02 * jax.random.normal(k_ctx, (n_ctx, ctx_dim))).astype(jnp.float32)

    # Deterministic stand-in for clip_model.token_embedding(tokenized_prompts):
    # embedding (n_cls, seq, ctx_dim); prefix = [:, :1], suffix = [:, 1+n_ctx:]
    embedding_f32 = jax.random.normal(k_emb, (n_cls, seq, ctx_dim)).astype(jnp.float32)

    def reference(ctx, prefix, suffix):
        dt = prefix.dtype
        ctx_b = jnp.broadcast_to(ctx.astype(dt)[None], (prefix.shape[0],) + ctx.shape)
        return jnp.concatenate([prefix, ctx_b, suffix], axis=1)

    # 1) bf16 embeddings + fp32 learnable ctx (common mixed-precision CLIP
    #    setup); explicit class_block=4 exercises the ragged tail (grid=3).
    emb_bf16 = embedding_f32.astype(jnp.bfloat16)
    pfx_bf16 = emb_bf16[:, :n_prefix, :]
    sfx_bf16 = emb_bf16[:, n_prefix + n_ctx:, :]
    ref_bf16 = reference(ctx_f32, pfx_bf16, sfx_bf16)
    out_bf16 = vl_prompt_learner_forward(ctx_f32, pfx_bf16, sfx_bf16,
                                         class_block=4)
    out_bf16 = jax.block_until_ready(out_bf16)
    assert out_bf16.shape == (n_cls, seq, ctx_dim)
    assert out_bf16.dtype == jnp.bfloat16
    assert jnp.array_equal(out_bf16, ref_bf16), "mismatch vs reference (bf16, CB=4)"

    # 2) fp32 everything, auto-sized class block: budget >> data, so CB is
    #    capped to cdiv(10, 2) = 5 (>= 2 grid steps for v7x) and 5 | 10, so
    #    grid = 2 with no ragged tail.
    pfx_f32 = embedding_f32[:, :n_prefix, :]
    sfx_f32 = embedding_f32[:, n_prefix + n_ctx:, :]
    ref_f32 = reference(ctx_f32, pfx_f32, sfx_f32)
    out_f32 = vl_prompt_learner_forward(ctx_f32, pfx_f32, sfx_f32)
    out_f32 = jax.block_until_ready(out_f32)
    assert out_f32.shape == (n_cls, seq, ctx_dim)
    assert jnp.array_equal(out_f32, ref_f32), "mismatch vs reference (f32, auto CB)"

    print("KERNEL_OK")
</pallas_src>

<mosaic_0001>
module attributes {stable_mosaic.version = 11 : i64} {
  func.func @_prompt_concat_kernel(%arg0: i32, %arg1: memref<4x1x128xbf16, #tpu.memory_space<vmem>>, %arg2: memref<2x128xf32, #tpu.memory_space<vmem>>, %arg3: memref<4x5x128xbf16, #tpu.memory_space<vmem>>, %arg4: memref<4x8x128xbf16, #tpu.memory_space<vmem>>) attributes {dimension_semantics = [#tpu.dimension_semantics<parallel>], iteration_bounds = array<i64: 3>, scalar_prefetch = 0 : i64, scratch_operands = 0 : i64, tpu.core_type = #tpu.core_type<tc>, window_params = [{transform_indices = @transform_0, window_bounds = array<i64: 4, 1, 128>}, {pipeline_mode = #tpu.pipeline_mode<synchronous>, transform_indices = @transform_1, window_bounds = array<i64: 2, 128>}, {transform_indices = @transform_2, window_bounds = array<i64: 4, 5, 128>}, {transform_indices = @transform_3, window_bounds = array<i64: 4, 8, 128>}]} {
    %c0 = arith.constant 0 : index
    %c0_0 = arith.constant 0 : index
    %c0_1 = arith.constant 0 : index
    %0 = vector.load %arg1[%c0, %c0_0, %c0_1] : memref<4x1x128xbf16, #tpu.memory_space<vmem>>, vector<4x1x128xbf16>
    %c0_2 = arith.constant 0 : index
    %c0_3 = arith.constant 0 : index
    %c0_4 = arith.constant 0 : index
    %1 = vector.load %arg4[%c0_2, %c0_3, %c0_4] : memref<4x8x128xbf16, #tpu.memory_space<vmem>>, vector<4x1x128xbf16>
    tpu.vector_store %arg4[%c0_2, %c0_3, %c0_4], %0 {strides = array<i32>} : memref<4x8x128xbf16, #tpu.memory_space<vmem>>, vector<4x1x128xbf16>,
    %c0_5 = arith.constant 0 : index
    %c0_6 = arith.constant 0 : index
    %2 = vector.load %arg2[%c0_5, %c0_6] : memref<2x128xf32, #tpu.memory_space<vmem>>, vector<2x128xf32>
    %3 = arith.truncf %2 : vector<2x128xf32> to vector<2x128xbf16>
    %4 = vector.shape_cast %3 : vector<2x128xbf16> to vector<1x2x128xbf16>
    %5 = vector.shape_cast %4 : vector<1x2x128xbf16> to vector<1x2x128xbf16>
    %6 = vector.broadcast %5 : vector<1x2x128xbf16> to vector<4x2x128xbf16>
    %c0_7 = arith.constant 0 : index
    %c1 = arith.constant 1 : index
    %c0_8 = arith.constant 0 : index
    %7 = vector.load %arg4[%c0_7, %c1, %c0_8] : memref<4x8x128xbf16, #tpu.memory_space<vmem>>, vector<4x2x128xbf16>
    tpu.vector_store %arg4[%c0_7, %c1, %c0_8], %6 {strides = array<i32>} : memref<4x8x128xbf16, #tpu.memory_space<vmem>>, vector<4x2x128xbf16>,
    %c0_9 = arith.constant 0 : index
    %c0_10 = arith.constant 0 : index
    %c0_11 = arith.constant 0 : index
    %8 = vector.load %arg3[%c0_9, %c0_10, %c0_11] : memref<4x5x128xbf16, #tpu.memory_space<vmem>>, vector<4x5x128xbf16>
    %c0_12 = arith.constant 0 : index
    %c3 = arith.constant 3 : index
    %c0_13 = arith.constant 0 : index
    %9 = vector.load %arg4[%c0_12, %c3, %c0_13] : memref<4x8x128xbf16, #tpu.memory_space<vmem>>, vector<4x5x128xbf16>
    tpu.vector_store %arg4[%c0_12, %c3, %c0_13], %8 {strides = array<i32>} : memref<4x8x128xbf16, #tpu.memory_space<vmem>>, vector<4x5x128xbf16>,
    return
  }
  func.func @transform_0(%arg0: i32) -> (i32, i32, i32) {
    %c0_i32 = arith.constant 0 : i32
    %c0_i32_0 = arith.constant 0 : i32
    %c0_i32_1 = arith.constant 0 : i32
    return %arg0, %c0_i32, %c0_i32_0 : i32, i32, i32
  }
  func.func @transform_1(%arg0: i32) -> (i32, i32) {
    %c0_i32 = arith.constant 0 : i32
    %c0_i32_0 = arith.constant 0 : i32
    %c0_i32_1 = arith.constant 0 : i32
    return %c0_i32, %c0_i32_0 : i32, i32
  }
  func.func @transform_2(%arg0: i32) -> (i32, i32, i32) {
    %c0_i32 = arith.constant 0 : i32
    %c0_i32_0 = arith.constant 0 : i32
    %c0_i32_1 = arith.constant 0 : i32
    return %arg0, %c0_i32, %c0_i32_0 : i32, i32, i32
  }
  func.func @transform_3(%arg0: i32) -> (i32, i32, i32) {
    %c0_i32 = arith.constant 0 : i32
    %c0_i32_0 = arith.constant 0 : i32
    %c0_i32_1 = arith.constant 0 : i32
    return %arg0, %c0_i32, %c0_i32_0 : i32, i32, i32
  }
}

</mosaic_0001>

<llo_original>
// kernel: tpu_custom_call.1
$region0: #{tpu_custom_call.1}
  #allocation0 [shape = 'u32[]', space=smem, size = 0x4, offset = 0x4, fixed_abs, tag = 'smem constant byte address 0x4 - core index']
  #allocation1 [shape = 'u32[72,128]{1,0:T(1,128)}', space=vmem, size = 0x9000, scoped, tag = 'internal scratch']
  %s0 = inlined_call_operand.vmem [shape: bf16[10,1,128], index: 0, kind: input, shape index: {}]
  %s1 = inlined_call_operand.vmem [shape: f32[2,128], index: 1, kind: input, shape index: {}]
  %s2 = inlined_call_operand.hbm [shape: bf16[10,5,128], index: 2, kind: input, shape index: {}]
  %s3 = inlined_call_operand.hbm [shape: bf16[10,8,128], index: 3, kind: output, shape index: {}]
  %s4 = sld [smem:[#allocation0]]
  $region49: #{tpu_custom_call.1} parent=0
    _
  %s6 = ssub.s32 1, %s4
  %s7 = scalar_select 0, %s6, %s4
  $region1: #{tpu_custom_call.1} parent=0
    #allocation2 [shape = 'u8[16384]{0}', space=vmem, size = 0x4000, scoped, tag = 'input window, operand 2']
    #allocation3 [shape = 's32[2]{0}', space=sflag, size = 0x8, scoped, tag = 'scoped memory for tpu_custom_call.1']
    #allocation4 [shape = 's32[2]{0}', space=sflag, size = 0x8, scoped, tag = 'scoped memory for tpu_custom_call.1']
    #allocation5 [shape = 'u8[16384]{0}', space=vmem, size = 0x4000, scoped, tag = 'output window, operand 0']
    %8 = vsyncpa [#allocation3], 0
    %s9 = scalar_lea.sflag [#allocation3], 1
    %10 = vsyncpa %s9, 0
    %11 = vsyncpa [#allocation4], 0
    %s12 = scalar_lea.sflag [#allocation4], 1
    %13 = vsyncpa %s12, 0
    loop: start=0, step=1, limit=5
    $region2: #{tpu_custom_call.1} parent=1 // loop_pre_header
      _
    $region3: #{tpu_custom_call.1} parent=1 // loop_header
      %s15 = sphi 0, %s19
      %p16 = scmp.ge.s32.totalorder %s15, 5
      %s25 = sphi 0, %s27
      %s28 = sphi 0, %s25
      %s29 = sphi 0, %s28
      %s45 = sphi 0, %s29
      %s49 = sphi 0, %s49
      %s51 = sphi 0, %s49
      %s52 = sphi 0, %s51
      %s66 = sphi 0, %s52
      %s72 = sphi 0, %s74
      %s75 = sphi 0, %s72
      %s76 = sphi 0, %s75
      %s92 = sphi 0, %s76
      %s98 = sphi 0, %s100
      %s101 = sphi 0, %s98
      %s102 = sphi 0, %s101
      %s118 = sphi 0, %s102
    $region4: #{tpu_custom_call.1} parent=1 // loop_header_branch
      %18 = sbr.rel (%p16) target = $region8
    $region5: #{tpu_custom_call.1} parent=1 // loop_body
      %s20 = ssub.s32 %s15, 1
      %s21 = ssub.s32 %s15, 2
      %s22 = sadd.s32 %s15, 1
      %s23 = ssub.s32 %s15, %s22
      %p24 = scmp.eq.s32.totalorder %s23, 0
      %s26 = sadd.s32 %s25, 1
      %s27 = scalar_select %p24, %s25, %s26
      %p30 = pneg %p24
      %p31 = scmp.eq.s32.totalorder %s15, 2
      %p32 = por %p30, %p31
      %p33 = scmp.ne.s32.totalorder %s25, %s28
      %p34 = scmp.eq.s32.totalorder %s15, 0
      %p35 = por %p33, %p34
      %p36 = scmp.ne.s32.totalorder %s25, %s28
      %p37 = scmp.eq.s32.totalorder %s20, 2
      %p38 = por %p36, %p37
      %p39 = scmp.ne.s32.totalorder %s28, %s29
      %p40 = scmp.eq.s32.totalorder %s20, 0
      %p41 = por %p39, %p40
      %p42 = scmp.ne.s32.totalorder %s28, %s29
      %p43 = scmp.eq.s32.totalorder %s21, 2
      %p44 = por %p42, %p43
      %p46 = scmp.ne.s32.totalorder %s29, %s45
      %p47 = scmp.eq.s32.totalorder %s21, 0
      %p48 = por %p46, %p47
      %s50 = sadd.s32 %s49, 1
      %p53 = scmp.eq.s32.totalorder %s15, 2
      %p54 = scmp.ne.s32.totalorder %s49, %s51
      %p55 = scmp.eq.s32.totalorder %s15, 0
      %p56 = por %p54, %p55
      %p57 = scmp.ne.s32.totalorder %s49, %s51
      %p58 = scmp.eq.s32.totalorder %s20, 2
      %p59 = por %p57, %p58
      %p60 = scmp.ne.s32.totalorder %s51, %s52
      %p61 = scmp.eq.s32.totalorder %s20, 0
      %p62 = por %p60, %p61
      %p63 = scmp.ne.s32.totalorder %s51, %s52
      %p64 = scmp.eq.s32.totalorder %s21, 2
      %p65 = por %p63, %p64
      %p67 = scmp.ne.s32.totalorder %s52, %s66
      %p68 = scmp.eq.s32.totalorder %s21, 0
      %p69 = por %p67, %p68
      %s70 = ssub.s32 %s15, %s22
      %p71 = scmp.eq.s32.totalorder %s70, 0
      %s73 = sadd.s32 %s72, 1
      %s74 = scalar_select %p71, %s72, %s73
      %p77 = pneg %p71
      %p78 = scmp.eq.s32.totalorder %s15, 2
      %p79 = por %p77, %p78
      %p80 = scmp.ne.s32.totalorder %s72, %s75
      %p81 = scmp.eq.s32.totalorder %s15, 0
      %p82 = por %p80, %p81
      %p83 = scmp.ne.s32.totalorder %s72, %s75
      %p84 = scmp.eq.s32.totalorder %s20, 2
      %p85 = por %p83, %p84
      %p86 = scmp.ne.s32.totalorder %s75, %s76
      %p87 = scmp.eq.s32.totalorder %s20, 0
      %p88 = por %p86, %p87
      %p89 = scmp.ne.s32.totalorder %s75, %s76
      %p90 = scmp.eq.s32.totalorder %s21, 2
      %p91 = por %p89, %p90
      %p93 = scmp.ne.s32.totalorder %s76, %s92
      %p94 = scmp.eq.s32.totalorder %s21, 0
      %p95 = por %p93, %p94
      %s96 = ssub.s32 %s15, %s22
      %p97 = scmp.eq.s32.totalorder %s96, 0
      %s99 = sadd.s32 %s98, 1
      %s100 = scalar_select %p97, %s98, %s99
      %p103 = pneg %p97
      %p104 = scmp.eq.s32.totalorder %s15, 2
      %p105 = por %p103, %p104
      %p106 = scmp.ne.s32.totalorder %s98, %s101
      %p107 = scmp.eq.s32.totalorder %s15, 0
      %p108 = por %p106, %p107
      %p109 = scmp.ne.s32.totalorder %s98, %s101
      %p110 = scmp.eq.s32.totalorder %s20, 2
      %p111 = por %p109, %p110
      %p112 = scmp.ne.s32.totalorder %s101, %s102
      %p113 = scmp.eq.s32.totalorder %s20, 0
      %p114 = por %p112, %p113
      %p115 = scmp.ne.s32.totalorder %s101, %s102
      %p116 = scmp.eq.s32.totalorder %s21, 2
      %p117 = por %p115, %p116
      %p119 = scmp.ne.s32.totalorder %s102, %s118
      %p120 = scmp.eq.s32.totalorder %s21, 0
      %p121 = por %p119, %p120
      %p122 = scmp.le.s32.totalorder 1, %s15
      %p123 = scmp.lt.s32.totalorder %s15, 4
      %p124 = pnand %p122, %p123
      %p125 = pneg %p124
      // Predicated region
      $region9: #{tpu_custom_call.1} parent=5 // pred_check
        _
      $region10: #{tpu_custom_call.1} parent=5 // pred_check_branch
        %127 = sbr.rel (%p124) target = $region12
      $region11: #{tpu_custom_call.1} parent=5 // pred_region
        %s128 = ssub.s32 %s15, 1
        // Predicated region
        $region13: #{tpu_custom_call.1} parent=11 // pred_check
          %p129 = pneg %p62
        $region14: #{tpu_custom_call.1} parent=11 // pred_check_branch
          %131 = sbr.rel (%p129) target = $region16
        $region15: #{tpu_custom_call.1} parent=11 // pred_region
          _
        $region16: #{tpu_custom_call.1} parent=11 // pred_fallthru
          _
      $region12: #{tpu_custom_call.1} parent=5 // pred_fallthru
        _
      %p132 = scmp.lt.s32.totalorder %s15, 3
      // Predicated region
      $region17: #{tpu_custom_call.1} parent=5 // pred_check
        %p133 = pneg %p132
      $region18: #{tpu_custom_call.1} parent=5 // pred_check_branch
        %135 = sbr.rel (%p133) target = $region20
      $region19: #{tpu_custom_call.1} parent=5 // pred_region
        // Predicated region
        $region21: #{tpu_custom_call.1} parent=19 // pred_check
          %p136 = pneg %p35
        $region22: #{tpu_custom_call.1} parent=19 // pred_check_branch
          %138 = sbr.rel (%p136) target = $region24
        $region23: #{tpu_custom_call.1} parent=19 // pred_region
          %s139 = smul.u32 4, %s15
          %s140 = ssub.s32 10, %s139
          %p141 = scmp.lt.s32.totalorder %s140, 4
          %s142 = scalar_select %p141, %s140, 4
          %p143 = scmp.lt.s32.totalorder %s139, 9
          %s144 = scalar_select %p143, %s139, 9
          %s145 = scalar_lea.vmem %s0, %s144
          %s146 = smul.u32 4, %s15
          %s147 = ssub.s32 10, %s146
          %p148 = scmp.lt.s32.totalorder %s147, 4
          %s149 = scalar_select %p148, %s147, 4
        $region24: #{tpu_custom_call.1} parent=19 // pred_fallthru
          _
        // Predicated region
        $region25: #{tpu_custom_call.1} parent=19 // pred_check
          %p150 = pneg %p82
        $region26: #{tpu_custom_call.1} parent=19 // pred_check_branch
          %152 = sbr.rel (%p150) target = $region28
        $region27: #{tpu_custom_call.1} parent=19 // pred_region
          %s153 = sand.u32 %s72, 1
          %s154 = scalar_lea.sflag [#allocation3], %s153
          %s155 = sand.u32 %s72, 1
          %s156 = smul.addr %s155, 16
          %s157 = scalar_lea.vmem [#allocation2], %s156
          %s158 = smul.u32 4, %s15
          %s159 = ssub.s32 10, %s158
          %p160 = scmp.lt.s32.totalorder %s159, 4
          %s161 = scalar_select %p160, %s159, 4
          %s162 = smul.u32 4, %s161
          %s163 = ssub.s32 16, %s162
          %s164 = sshll.u32 %s163, 4
          %165 = vsyncadd %s154, %s164
          %p166 = scmp.ne.s32.totalorder 0, %s162
          %s167 = smul.addr %s158, 4
          %s168 = scalar_lea.hbm %s2, %s167
          %s169 = smul.u32 4, %s161
          %s170 = sshll.u32 %s168, 4
          %s171 = int_to_ptr.hbm [resolvable:$true] %s170
          %s172 = sshll.u32 %s157, 4
          %s173 = int_to_ptr.vmem [resolvable:$true] %s172
          %s174 = sshll.u32 %s169, 4
          %178 = dma.hbm_to_vmem [thread:$0]  (%p166), %s171, %s174, %s173, %s154, 64, 64, 4
        $region28: #{tpu_custom_call.1} parent=19 // pred_fallthru
          _
      $region20: #{tpu_custom_call.1} parent=5 // pred_fallthru
        _
      %p179 = scmp.le.s32.totalorder 1, %s15
      %p180 = scmp.lt.s32.totalorder %s15, 4
      %p181 = pnand %p179, %p180
      %p182 = pneg %p181
      // Predicated region
      $region29: #{tpu_custom_call.1} parent=5 // pred_check
        _
      $region30: #{tpu_custom_call.1} parent=5 // pred_check_branch
        %184 = sbr.rel (%p181) target = $region32
      $region31: #{tpu_custom_call.1} parent=5 // pred_region
        %s185 = ssub.s32 %s15, 1
        %s186 = sand.u32 %s75, 1
        %s187 = scalar_lea.sflag [#allocation3], %s186
        %s188 = sand.u32 %s75, 1
        %s189 = smul.addr %s188, 16
        %s190 = scalar_lea.vmem [#allocation2], %s189
        // Predicated region
        $region33: #{tpu_custom_call.1} parent=31 // pred_check
          %p191 = pneg %p88
        $region34: #{tpu_custom_call.1} parent=31 // pred_check_branch
          %193 = sbr.rel (%p191) target = $region36
        $region35: #{tpu_custom_call.1} parent=31 // pred_region
          %195 = dma.done %s187, 256
        $region36: #{tpu_custom_call.1} parent=31 // pred_fallthru
          _
        %s196 = smul.u32 4, %s20
        %s197 = ssub.s32 10, %s196
        %p198 = scmp.lt.s32.totalorder %s197, 4
        %s199 = scalar_select %p198, %s197, 4
        %p200 = scmp.lt.s32.totalorder %s196, 9
        %s201 = scalar_select %p200, %s196, 9
        %s202 = scalar_lea.vmem %s0, %s201
        %p203 = pneg %p41
        %p204 = pneg %p38
        %p205 = pneg %p62
        %p206 = pneg %p59
        %s207 = sand.u32 %s75, 1
        %s208 = scalar_lea.sflag [#allocation3], %s207
        %s209 = sand.u32 %s75, 1
        %s210 = smul.addr %s209, 16
        %s211 = scalar_lea.vmem [#allocation2], %s210
        %p212 = pneg %p88
        %p213 = pneg %p85
        %p214 = pneg %p114
        %p215 = pneg %p111
        %s216 = sand.u32 %s101, 1
        %s217 = scalar_lea.sflag [#allocation4], %s216
        %s218 = sand.u32 %s101, 1
        %s219 = smul.addr %s218, 16
        %s220 = scalar_lea.vmem [#allocation5], %s219
        %s221 = smul.u32 4, %s20
        %s222 = ssub.s32 10, %s221
        %p223 = scmp.lt.s32.totalorder %s222, 4
        %s224 = scalar_select %p223, %s222, 4
        %p225 = scmp.lt.s32.totalorder %s221, 9
        %s226 = scalar_select %p225, %s221, 9
        %s227 = scalar_lea.vmem %s0, %s226
        %s228 = smul.u32 4, %s20
        %s229 = ssub.s32 10, %s228
        %p230 = scmp.lt.s32.totalorder %s229, 4
        %s231 = scalar_select %p230, %s229, 4
        %s232 = smul.u32 4, %s20
        %s233 = ssub.s32 10, %s232
        %p234 = scmp.lt.s32.totalorder %s233, 4
        %s235 = scalar_select %p234, %s233, 4
        %s236 = smul.u32 4, %s235
        %s237 = smul.u32 4, %s20
        %s238 = ssub.s32 10, %s237
        %p239 = scmp.lt.s32.totalorder %s238, 4
        %s240 = scalar_select %p239, %s238, 4
        %s241 = smul.u32 4, %s240
        %v242 = vld [vmem:[%s227] sm:$0x1]
        %v243 = vld [vmem:[%s227 + $0x1] sm:$0x1]
        %v244 = vld [vmem:[%s227 + $0x2] sm:$0x1]
        %v245 = vld [vmem:[%s227 + $0x3] sm:$0x1]
        %vm246 = vcmask 1040384
        %vm247 = vsmask.f32 256
        %vm248 = vmand %vm246, %vm247
        %v249 = vld [vmem:[%s220] sm:$0x1]
        %v250 = vsel %vm248, %v242, %v249
        %251 = vst [vmem:[%s220] sm:$0x1] %v250
        %v252 = vld [vmem:[%s220 + $0x4] sm:$0x1]
        %v253 = vsel %vm248, %v243, %v252
        %254 = vst [vmem:[%s220 + $0x4] sm:$0x1] %v253
        %v255 = vld [vmem:[%s220 + $0x8] sm:$0x1]
        %v256 = vsel %vm248, %v244, %v255
        %257 = vst [vmem:[%s220 + $0x8] sm:$0x1] %v256
        %v258 = vld [vmem:[%s220 + $0xc] sm:$0x1]
        %v259 = vsel %vm248, %v245, %v258
        %260 = vst [vmem:[%s220 + $0xc] sm:$0x1] %v259
        %v261 = vld [vmem:[%s1] sm:$0x3]
        %v262 = vpack.c.bf16 %v261, %v261
        %v264 = vshrl.u32 %v262, 16
        %v266 = vrot.slane %v264, 7
        %v267 = vshll.u32 %v262, 16
        %v269 = vor.u32 %v266, %v267
        %vm271 = vcmask 1041408
        %vm272 = vsmask.f32 1282
        %vm273 = vmand %vm271, %vm272
        %v274 = vld [vmem:[%s220] sm:$0x3]
        %v275 = vsel %vm273, %v269, %v274
        %276 = vst [vmem:[%s220] sm:$0x3] %v275
        %v277 = vld [vmem:[%s220 + $0x4] sm:$0x3]
        %v278 = vsel %vm273, %v269, %v277
        %279 = vst [vmem:[%s220 + $0x4] sm:$0x3] %v278
        %v280 = vld [vmem:[%s220 + $0x8] sm:$0x3]
        %v281 = vsel %vm273, %v269, %v280
        %282 = vst [vmem:[%s220 + $0x8] sm:$0x3] %v281
        %v283 = vld [vmem:[%s220 + $0xc] sm:$0x3]
        %v284 = vsel %vm273, %v269, %v283
        %285 = vst [vmem:[%s220 + $0xc] sm:$0x3] %v284
        %v286 = vld [vmem:[%s190] sm:$0x7]
        %v287 = vld [vmem:[%s190 + $0x4] sm:$0x7]
        %v288 = vld [vmem:[%s190 + $0x8] sm:$0x7]
        %v289 = vld [vmem:[%s190 + $0xc] sm:$0x7]
        %v291 = vshrl.u32 %v286, 16
        %v293 = vrot.slane %v291, 6
        %v294 = vshll.u32 %v286, 16
        %v296 = vrot.slane %v294, 7
        %v297 = vor.u32 %v293, %v296
        %v299 = vshrl.u32 %v287, 16
        %v301 = vrot.slane %v299, 6
        %v302 = vshll.u32 %v287, 16
        %v304 = vrot.slane %v302, 7
        %v305 = vor.u32 %v301, %v304
        %v307 = vshrl.u32 %v288, 16
        %v309 = vrot.slane %v307, 6
        %v310 = vshll.u32 %v288, 16
        %v312 = vrot.slane %v310, 7
        %v313 = vor.u32 %v309, %v312
        %v315 = vshrl.u32 %v289, 16
        %v317 = vrot.slane %v315, 6
        %v318 = vshll.u32 %v289, 16
        %v320 = vrot.slane %v318, 7
        %v321 = vor.u32 %v317, %v320
        %vm326 = vcmask 1043457
        %vm327 = vsmask.f32 7942
        %vm328 = vmand %vm326, %vm327
        %v329 = vld [vmem:[%s220] sm:$0xe]
        %v330 = vsel %vm328, %v297, %v329
        %331 = vst [vmem:[%s220] sm:$0xe] %v330
        %v332 = vld [vmem:[%s220 + $0x4] sm:$0xe]
        %v333 = vsel %vm328, %v305, %v332
        %334 = vst [vmem:[%s220 + $0x4] sm:$0xe] %v333
        %v335 = vld [vmem:[%s220 + $0x8] sm:$0xe]
        %v336 = vsel %vm328, %v313, %v335
        %337 = vst [vmem:[%s220 + $0x8] sm:$0xe] %v336
        %v338 = vld [vmem:[%s220 + $0xc] sm:$0xe]
        %v339 = vsel %vm328, %v321, %v338
        %340 = vst [vmem:[%s220 + $0xc] sm:$0xe] %v339
        %s341 = sand.u32 %s101, 1
        %s342 = scalar_lea.sflag [#allocation4], %s341
        %s343 = sand.u32 %s101, 1
        %s344 = smul.addr %s343, 16
        %s345 = scalar_lea.vmem [#allocation5], %s344
        // Predicated region
        $region37: #{tpu_custom_call.1} parent=31 // pred_check
          %p346 = pneg %p111
        $region38: #{tpu_custom_call.1} parent=31 // pred_check_branch
          %348 = sbr.rel (%p346) target = $region40
        $region39: #{tpu_custom_call.1} parent=31 // pred_region
          %s349 = smul.u32 4, %s20
          %s350 = ssub.s32 10, %s349
          %p351 = scmp.lt.s32.totalorder %s350, 4
          %s352 = scalar_select %p351, %s350, 4
          %s353 = smul.u32 4, %s352
          %s354 = ssub.s32 16, %s353
          %s355 = sshll.u32 %s354, 4
          %356 = vsyncadd %s342, %s355
          %p357 = scmp.ne.s32.totalorder 0, %s353
          %s358 = smul.addr %s349, 4
          %s359 = scalar_lea.hbm %s3, %s358
          %s360 = smul.u32 4, %s352
          %s361 = sshll.u32 %s345, 4
          %s362 = int_to_ptr.vmem [resolvable:$true] %s361
          %s363 = sshll.u32 %s359, 4
          %s364 = int_to_ptr.hbm [resolvable:$true] %s363
          %s365 = sshll.u32 %s360, 4
          %369 = dma.vmem_to_hbm [thread:$0]  (%p357), %s362, %s365, %s364, %s342, 64, 64, 4
        $region40: #{tpu_custom_call.1} parent=31 // pred_fallthru
          _
      $region32: #{tpu_custom_call.1} parent=5 // pred_fallthru
        _
      %p370 = scmp.le.s32.totalorder 2, %s15
      // Predicated region
      $region41: #{tpu_custom_call.1} parent=5 // pred_check
        %p371 = pneg %p370
      $region42: #{tpu_custom_call.1} parent=5 // pred_check_branch
        %373 = sbr.rel (%p371) target = $region44
      $region43: #{tpu_custom_call.1} parent=5 // pred_region
        %s374 = ssub.s32 %s15, 2
        // Predicated region
        $region45: #{tpu_custom_call.1} parent=43 // pred_check
          %p375 = pneg %p117
        $region46: #{tpu_custom_call.1} parent=43 // pred_check_branch
          %377 = sbr.rel (%p375) target = $region48
        $region47: #{tpu_custom_call.1} parent=43 // pred_region
          %s378 = sand.u32 %s102, 1
          %s379 = scalar_lea.sflag [#allocation4], %s378
          %s380 = sand.u32 %s102, 1
          %s381 = smul.addr %s380, 16
          %s382 = scalar_lea.vmem [#allocation5], %s381
          %384 = dma.done %s379, 256
        $region48: #{tpu_custom_call.1} parent=43 // pred_fallthru
          _
      $region44: #{tpu_custom_call.1} parent=5 // pred_fallthru
        _
    $region6: #{tpu_custom_call.1} parent=1 // loop_footer
      %s19 = sadd.s32 1, %s15
    $region7: #{tpu_custom_call.1} parent=1 // loop_footer_branch
      %14 = sbr.rel target = $region3
    $region8: #{tpu_custom_call.1} parent=1 // loop_exit
      _
    %385 = vsyncpa [#allocation3], 1
    %s386 = scalar_lea.sflag [#allocation3], 1
    %387 = vsyncpa %s386, 1
    %388 = vsyncpa [#allocation4], 1
    %s389 = scalar_lea.sflag [#allocation4], 1
    %390 = vsyncpa %s389, 1

</llo_original>
